<compile_context>
chip_gen: v5e
topology: v5e:2x2
jax: 0.10.0
libtpu: 0.0.40
codegen_flags: <defaults>
</compile_context>

<pallas_src>
import jax
import jax.numpy as jnp
from jax.experimental import pallas as pl
from jax.experimental.pallas import tpu as pltpu


# ----------------------------------------------------------------------------
# Shared swish math: one EUP op (tanh) per element, rest on the VPU.
# ----------------------------------------------------------------------------
def _swish_f32(x):
    # swish(x) = x * sigmoid(x) = 0.5 * x * (tanh(x / 2) + 1)
    return 0.5 * x * (jnp.tanh(0.5 * x) + 1.0)


def _vmem_capacity_bytes() -> int:
    try:
        return int(pltpu.get_tpu_info().vmem_capacity_bytes)
    except Exception:
        return 64 * 1024 * 1024  # conservative (v7x per-TC VMEM)


# ----------------------------------------------------------------------------
# 1. Standalone elementwise swish (lane-dense slab, relaxed alignment)
# ----------------------------------------------------------------------------
def _swish_kernel(x_ref, o_ref):
    xf = x_ref[...].astype(jnp.float32)   # f32 compute; safe on v5e too
    o_ref[...] = _swish_f32(xf).astype(o_ref.dtype)


def _swish_2d(x2d: jax.Array) -> jax.Array:
    rows, lanes = x2d.shape
    dtype = x2d.dtype
    itemsize = jnp.dtype(dtype).itemsize
    bytes_per_row = lanes * itemsize
    total_bytes = rows * bytes_per_row

    vmem_cap = _vmem_capacity_bytes()
    # in + out, double-buffered => ~4x block footprint; stay well inside VMEM:
    # 16 MiB blocks on 128-MiB chips (v5e/v6e), 8 MiB on v7x (64 MiB VMEM).
    max_block_bytes = max(1 << 20, min(16 << 20, vmem_cap // 8))

    if rows < 8:
        rows_per_block = rows                      # full-array block (legal)
    else:
        rows_per_block = max(8, (max_block_bytes // bytes_per_row) // 8 * 8)
        if total_bytes > (1 << 20):
            # >= 2 grid steps so both v7x TensorCores stream ("parallel" axis).
            rows_per_block = min(rows_per_block, max(8, (rows // 2) // 8 * 8))
        rows_per_block = min(rows_per_block, max(8, rows // 8 * 8))

    grid = (pl.cdiv(rows, rows_per_block),)
    block_bytes = rows_per_block * bytes_per_row
    vmem_limit = int(min(vmem_cap, max(8 << 20, 4 * block_bytes + (4 << 20))))

    n = rows * lanes
    cost = pl.CostEstimate(
        flops=4 * n,            # ~4 VPU flops per element
        transcendentals=n,      # one tanh per element
        bytes_accessed=2 * n * itemsize,
    )

    return pl.pallas_call(
        _swish_kernel,
        out_shape=jax.ShapeDtypeStruct((rows, lanes), dtype),
        grid_spec=pltpu.PrefetchScalarGridSpec(
            num_scalar_prefetch=0,
            grid=grid,
            in_specs=[pl.BlockSpec((rows_per_block, lanes), lambda i: (i, 0))],
            out_specs=pl.BlockSpec((rows_per_block, lanes), lambda i: (i, 0)),
        ),
        compiler_params=pltpu.CompilerParams(
            dimension_semantics=("parallel",),
            vmem_limit_bytes=vmem_limit,
        ),
        cost_estimate=cost,
    )(x2d)


def swish_pallas(x: jax.Array) -> jax.Array:
    """Elementwise swish over an arbitrarily-shaped array via a Pallas kernel."""
    orig_shape = x.shape
    n = x.size
    if n == 0:
        return x

    flat = jnp.ravel(x)

    # Widest lane width that divides n exactly; rows%8 NOT required (the grid
    # masks the partial last row-block), so almost no shape needs the tail path.
    lanes = next((c for c in (1024, 512, 256, 128) if n % c == 0), None)

    if lanes is not None:
        out2d = _swish_2d(flat.reshape(n // lanes, lanes))
        return out2d.reshape(orig_shape)

    # Odd size: 128-aligned bulk through the kernel, tiny (<128-elem) tail in
    # plain jnp -- avoids the old full-tensor pad + slice (2 extra HBM passes).
    bulk_n = (n // 128) * 128
    tail = flat[bulk_n:].astype(jnp.float32)
    tail_out = (tail * jax.nn.sigmoid(tail)).astype(x.dtype)
    if bulk_n == 0:
        return tail_out.reshape(orig_shape)
    bulk_out = _swish_2d(flat[:bulk_n].reshape(bulk_n // 128, 128)).reshape(-1)
    return jnp.concatenate([bulk_out, tail_out]).reshape(orig_shape)


# ----------------------------------------------------------------------------
# 2. Fused Linear + swish (classifier head pattern: nn.Linear -> swish)
#    swish applied in the matmul finalize -> no extra HBM pass for activation.
# ----------------------------------------------------------------------------
def _linear_swish_kernel(x_ref, w_ref, b_ref, o_ref, acc_ref):
    k = pl.program_id(2)

    @pl.when(k == 0)
    def _():
        acc_ref[...] = jnp.zeros_like(acc_ref)

    acc_ref[...] += jnp.dot(x_ref[...], w_ref[...],
                            preferred_element_type=jnp.float32)

    @pl.when(k == pl.num_programs(2) - 1)
    def _():
        y = acc_ref[...] + b_ref[...].astype(jnp.float32)
        o_ref[...] = _swish_f32(y).astype(o_ref.dtype)   # fused swish epilogue


def _pick_tile(dim: int, candidates) -> int:
    for c in candidates:
        if dim % c == 0:
            return c
    return dim  # full-dim block (always legal)


def linear_swish_pallas(x: jax.Array, w: jax.Array, b: jax.Array) -> jax.Array:
    """swish(x @ w.T + b), matching torch.nn.Linear: x (M,K), w (N,K), b (N,)."""
    M, K = x.shape
    N, K2 = w.shape
    assert K == K2 and b.shape == (N,)

    wt = jnp.swapaxes(w, 0, 1)          # (K, N), lane-dense along N
    b2 = b.reshape(1, N)

    tm = _pick_tile(M, (256, 128, 64, 32, 16, 8))
    tn = _pick_tile(N, (512, 256, 128))
    tk = _pick_tile(K, (512, 256, 128))  # must divide K exactly (reduction axis)

    grid = (M // tm, N // tn, K // tk)

    cost = pl.CostEstimate(
        flops=2 * M * N * K + 5 * M * N,
        transcendentals=M * N,
        bytes_accessed=(M * K + K * N + N + M * N) * jnp.dtype(x.dtype).itemsize,
    )

    return pl.pallas_call(
        _linear_swish_kernel,
        out_shape=jax.ShapeDtypeStruct((M, N), x.dtype),
        grid_spec=pltpu.PrefetchScalarGridSpec(
            num_scalar_prefetch=0,
            grid=grid,
            in_specs=[
                pl.BlockSpec((tm, tk), lambda i, j, k: (i, k)),
                pl.BlockSpec((tk, tn), lambda i, j, k: (k, j)),
                pl.BlockSpec((1, tn), lambda i, j, k: (0, j)),
            ],
            out_specs=pl.BlockSpec((tm, tn), lambda i, j, k: (i, j)),
            scratch_shapes=[pltpu.VMEM((tm, tn), jnp.float32)],
        ),
        compiler_params=pltpu.CompilerParams(
            dimension_semantics=("parallel", "parallel", "arbitrary"),
        ),
        cost_estimate=cost,
    )(x, wt, b2)


# ----------------------------------------------------------------------------
if __name__ == "__main__":
    key = jax.random.PRNGKey(0)
    k1, k2, k3, k4, k5 = jax.random.split(key, 5)

    # --- standalone swish on a small NCHW activation (conv-block shape) -----
    x = jax.random.uniform(k1, (2, 4, 16, 16), dtype=jnp.float32)
    out = swish_pallas(x)
    jax.block_until_ready(out)
    ref = x * jax.nn.sigmoid(x)
    assert out.shape == x.shape and out.dtype == x.dtype
    assert jnp.allclose(out, ref, atol=1e-5, rtol=1e-5)

    # bf16 I/O (f32 compute inside the kernel, cast back on store).
    xb = x.astype(jnp.bfloat16)
    outb = swish_pallas(xb)
    jax.block_until_ready(outb)
    refb = (x * jax.nn.sigmoid(x)).astype(jnp.bfloat16)
    assert outb.dtype == jnp.bfloat16
    assert jnp.allclose(outb.astype(jnp.float32), refb.astype(jnp.float32),
                        atol=1e-2, rtol=1e-2)

    # Relaxed-alignment path: rows (=9) not a multiple of 8 -> 2 grid steps
    # with a masked partial last block, no padding copy.
    y = jax.random.normal(k2, (4, 9, 128), dtype=jnp.float32)
    outy = swish_pallas(y)
    jax.block_until_ready(outy)
    assert jnp.allclose(outy, y * jax.nn.sigmoid(y), atol=1e-5, rtol=1e-5)

    # Odd total size: 128-aligned bulk through the kernel + tiny jnp tail.
    z = jax.random.normal(k3, (3, 5, 47), dtype=jnp.float32)
    outz = swish_pallas(z)
    jax.block_until_ready(outz)
    assert outz.shape == z.shape
    assert jnp.allclose(outz, z * jax.nn.sigmoid(z), atol=1e-5, rtol=1e-5)

    # --- fused Linear + swish (classifier-head pattern), small dims ---------
    M, K, N = 8, 256, 512
    xl = jax.random.normal(k4, (M, K), dtype=jnp.float32) * 0.5
    w = jax.random.normal(k5, (N, K), dtype=jnp.float32) * 0.01  # nn.Linear init
    b = jnp.zeros((N,), dtype=jnp.float32)
    outl = linear_swish_pallas(xl, w, b)
    jax.block_until_ready(outl)
    pre = jnp.dot(xl, w.T, preferred_element_type=jnp.float32) + b
    refl = pre * jax.nn.sigmoid(pre)
    assert outl.shape == (M, N)
    assert jnp.allclose(outl, refl, atol=1e-3, rtol=1e-3)

    print("KERNEL_OK")
</pallas_src>

<mosaic_0001>
module attributes {stable_mosaic.version = 11 : i64} {
  func.func @_swish_kernel(%arg0: i32, %arg1: memref<2x1024xf32, #tpu.memory_space<vmem>>, %arg2: memref<2x1024xf32, #tpu.memory_space<vmem>>) attributes {dimension_semantics = [#tpu.dimension_semantics<parallel>], iteration_bounds = array<i64: 1>, scalar_prefetch = 0 : i64, scratch_operands = 0 : i64, tpu.core_type = #tpu.core_type<tc>, window_params = [{transform_indices = @transform_0, window_bounds = array<i64: 2, 1024>}, {transform_indices = @transform_1, window_bounds = array<i64: 2, 1024>}]} {
    %c0 = arith.constant 0 : index
    %c0_0 = arith.constant 0 : index
    %0 = vector.load %arg1[%c0, %c0_0] : memref<2x1024xf32, #tpu.memory_space<vmem>>, vector<2x1024xf32>
    %cst = arith.constant 5.000000e-01 : f32
    %1 = vector.broadcast %cst : f32 to vector<2x1024xf32>
    %2 = arith.mulf %1, %0 : vector<2x1024xf32>
    %cst_1 = arith.constant 5.000000e-01 : f32
    %3 = vector.broadcast %cst_1 : f32 to vector<2x1024xf32>
    %4 = arith.mulf %3, %0 : vector<2x1024xf32>
    %5 = math.tanh %4 : vector<2x1024xf32>
    %cst_2 = arith.constant 1.000000e+00 : f32
    %6 = vector.broadcast %cst_2 : f32 to vector<2x1024xf32>
    %7 = arith.addf %5, %6 : vector<2x1024xf32>
    %8 = arith.mulf %2, %7 : vector<2x1024xf32>
    %c0_3 = arith.constant 0 : index
    %c0_4 = arith.constant 0 : index
    %9 = vector.load %arg2[%c0_3, %c0_4] : memref<2x1024xf32, #tpu.memory_space<vmem>>, vector<2x1024xf32>
    tpu.vector_store %arg2[%c0_3, %c0_4], %8 {strides = array<i32>} : memref<2x1024xf32, #tpu.memory_space<vmem>>, vector<2x1024xf32>,
    return
  }
  func.func @transform_0(%arg0: i32) -> (i32, i32) {
    %c0_i32 = arith.constant 0 : i32
    %c0_i32_0 = arith.constant 0 : i32
    return %arg0, %c0_i32 : i32, i32
  }
  func.func @transform_1(%arg0: i32) -> (i32, i32) {
    %c0_i32 = arith.constant 0 : i32
    %c0_i32_0 = arith.constant 0 : i32
    return %arg0, %c0_i32 : i32, i32
  }
}

</mosaic_0001>

<llo_original>
// kernel: tpu_custom_call.1
$region0: #{tpu_custom_call.1}
  #allocation0 [shape = 'u32[]', space=smem, size = 0x4, offset = 0x4, fixed_abs, tag = 'smem constant byte address 0x4 - core index']
  #allocation1 [shape = 'u32[72,128]{1,0:T(1,128)}', space=vmem, size = 0x9000, scoped, tag = 'internal scratch']
  %s0 = inlined_call_operand.hbm [shape: f32[2,1024], index: 0, kind: input, shape index: {}]
  %s1 = inlined_call_operand.hbm [shape: f32[2,1024], index: 1, kind: output, shape index: {}]
  %s2 = sld [smem:[#allocation0]]
  $region18: #{tpu_custom_call.1} parent=0
    _
  %s4 = ssub.s32 1, %s2
  %s5 = scalar_select 0, %s4, %s2
  $region1: #{tpu_custom_call.1} parent=0
    #allocation2 [shape = 'u8[8192]{0}', space=vmem, size = 0x2000, scoped, tag = 'input window, operand 0, single buffered']
    #allocation3 [shape = 's32[1]{0}', space=sflag, size = 0x4, scoped, tag = 'scoped memory for tpu_custom_call.1']
    #allocation4 [shape = 's32[1]{0}', space=sflag, size = 0x4, scoped, tag = 'scoped memory for tpu_custom_call.1']
    #allocation5 [shape = 'u8[8192]{0}', space=vmem, size = 0x2000, scoped, tag = 'output window, operand 0, single buffered']
    %6 = vsyncpa [#allocation3], 0
    %7 = vsyncpa [#allocation4], 0
    // Predicated region
    $region2: #{tpu_custom_call.1} parent=1 // pred_check
      _
    $region3: #{tpu_custom_call.1} parent=1 // pred_check_branch
      %9 = sbr.rel (0) target = $region5
    $region4: #{tpu_custom_call.1} parent=1 // pred_region
      %11 = vsyncadd [#allocation3], 0
      %s13 = sshll.u32 %s0, 4
      %s14 = int_to_ptr.hbm [resolvable:$true] %s13
      %s15 = sshll.u32 [#allocation2], 4
      %s16 = int_to_ptr.vmem [resolvable:$true] %s15
      %18 = dma.hbm_to_vmem [thread:$0]  %s14, 256, %s16, [#allocation3]
    $region5: #{tpu_custom_call.1} parent=1 // pred_fallthru
      _
    // Predicated region
    $region6: #{tpu_custom_call.1} parent=1 // pred_check
      _
    $region7: #{tpu_custom_call.1} parent=1 // pred_check_branch
      %20 = sbr.rel (0) target = $region9
    $region8: #{tpu_custom_call.1} parent=1 // pred_region
      %22 = dma.done [#allocation3], 256
    $region9: #{tpu_custom_call.1} parent=1 // pred_fallthru
      _
    %v23 = vld [vmem:[#allocation2] sm:$0xff]
    %v24 = vld [vmem:[#allocation2 + $0x8] sm:$0xff]
    %v25 = vmul.f32 %v23, 0.5
    %v26 = vmul.f32 %v24, 0.5
    %v27 = vtanh.pop %v25
    %v28 = vtanh.pop %v26
    %v29 = vadd.f32 %v27, 1.0
    %v30 = vadd.f32 %v28, 1.0
    %v31 = vmul.f32 %v25, %v29
    %v32 = vmul.f32 %v26, %v30
    %33 = vst [vmem:[#allocation5] sm:$0xff] %v31
    %34 = vst [vmem:[#allocation5 + $0x8] sm:$0xff] %v32
    // Predicated region
    $region10: #{tpu_custom_call.1} parent=1 // pred_check
      _
    $region11: #{tpu_custom_call.1} parent=1 // pred_check_branch
      %36 = sbr.rel (0) target = $region13
    $region12: #{tpu_custom_call.1} parent=1 // pred_region
      %38 = vsyncadd [#allocation4], 0
      %s40 = sshll.u32 [#allocation5], 4
      %s41 = int_to_ptr.vmem [resolvable:$true] %s40
      %s42 = sshll.u32 %s1, 4
      %s43 = int_to_ptr.hbm [resolvable:$true] %s42
      %45 = dma.vmem_to_hbm [thread:$0]  %s41, 256, %s43, [#allocation4]
    $region13: #{tpu_custom_call.1} parent=1 // pred_fallthru
      _
    // Predicated region
    $region14: #{tpu_custom_call.1} parent=1 // pred_check
      _
    $region15: #{tpu_custom_call.1} parent=1 // pred_check_branch
      %47 = sbr.rel (0) target = $region17
    $region16: #{tpu_custom_call.1} parent=1 // pred_region
      %49 = dma.done [#allocation4], 256
    $region17: #{tpu_custom_call.1} parent=1 // pred_fallthru
      _
    %50 = vsyncpa [#allocation3], 1
    %51 = vsyncpa [#allocation4], 1

</llo_original>
